<compile_context>
chip_gen: v5e
topology: v5e:2x2
jax: 0.10.0
libtpu: 0.0.40
codegen_flags: <defaults>
</compile_context>

<pallas_src>
import functools

import jax
import jax.numpy as jnp
from jax.experimental import pallas as pl
from jax.experimental.pallas import tpu as pltpu

LANE = 128        # TPU lane width; final logits padded to this for a lane-dense store
NEG_BIG = -1e30   # bias for padded logit lanes (never wins max, exp -> 0)


def _mxu_dot(a, b):
    """bf16-operand matmul with f32 accumulation (MXU-native on v6e/v7x)."""
    return jnp.dot(a.astype(jnp.bfloat16), b.astype(jnp.bfloat16),
                   preferred_element_type=jnp.float32)


def net_kernel(x_ref, adj_ref,
               w1c_ref, b1_ref,
               w2c_ref, b2_ref,
               wl1_ref, bl1_ref,
               wl2_ref, bl2_ref,
               wl3_ref, bl3_ref,
               out_ref):
    x = x_ref[...]        # [N, F_in]  (bf16)
    adj = adj_ref[...]    # [N, N]     (bf16, counts of incoming edges)

    # ---- conv1: GraphConv(F_in -> 128) ----
    # One lane-dense dot produces both the root and the rel projection:
    #   xw = x @ [W_root | W_rel]   ([N, 256])
    #   h  = xw[:, :128] + A @ xw[:, 128:] + b      (128-wide halves: vreg-aligned slices)
    xw = _mxu_dot(x, w1c_ref[...])                                   # [N, 256] f32
    h = xw[:, :128] + _mxu_dot(adj, xw[:, 128:]) + b1_ref[...]
    h = jnp.maximum(h, 0.0)            # relu; dropout = identity (eval mode)

    # ---- conv2: GraphConv(128 -> 64), contraction-axis fusion (K = 256) ----
    # Concatenate in bf16: halves the materialized copy and feeds the MXU directly.
    h_bf = h.astype(jnp.bfloat16)
    agg2_bf = _mxu_dot(adj, h_bf).astype(jnp.bfloat16)               # [N, 128] bf16
    h = _mxu_dot(jnp.concatenate([h_bf, agg2_bf], axis=-1), w2c_ref[...]) + b2_ref[...]
    # (no relu here: module applies relu only after lin1)

    # ---- lin1 (64 -> 128) + relu ; dropout = identity (eval mode) ----
    h = jnp.maximum(_mxu_dot(h, wl1_ref[...]) + bl1_ref[...], 0.0)

    # ---- lin2 (128 -> 64) + relu ----
    h = jnp.maximum(_mxu_dot(h, wl2_ref[...]) + bl2_ref[...], 0.0)

    # ---- lin3 (64 -> num_class, lane-padded to 128) + log_softmax ----
    # Padded lanes carry bias NEG_BIG: they never win the max and exp() -> 0,
    # so they do not perturb the log-sum-exp over the real classes.
    logits = _mxu_dot(h, wl3_ref[...]) + bl3_ref[...]                # [N, 128] f32
    m = jnp.max(logits, axis=-1, keepdims=True)
    z = logits - m
    lse = jnp.log(jnp.sum(jnp.exp(z), axis=-1, keepdims=True))
    out_ref[...] = (z - lse).astype(out_ref.dtype)


@functools.partial(jax.jit, static_argnames=("num_class",))
def net_forward(x, adj, params, num_class):
    """x: [N, F_in] float32, adj: [N, N] float32 dense adjacency (A[dst, src]=#edges)."""
    assert num_class <= LANE
    n, f_in = x.shape
    (w1r, w1s, b1, w2r, w2s, b2, wl1, bl1, wl2, bl2, wl3, bl3) = params
    bf16 = jnp.bfloat16

    # conv1: fuse along the OUTPUT axis -> x @ [W_root | W_rel]
    w1_cat = jnp.concatenate([w1s, w1r], axis=1).astype(bf16)        # [F_in, 256]
    # conv2: fuse along the CONTRACTION axis -> [h | A@h] @ [W_root; W_rel]
    w2_cat = jnp.concatenate([w2s, w2r], axis=0).astype(bf16)        # [256, 64]

    # Lane-dense epilogue: pad lin3 to LANE output columns.
    wl3_p = jnp.zeros((wl3.shape[0], LANE), jnp.float32).at[:, :num_class].set(wl3)
    bl3_p = jnp.full((1, LANE), NEG_BIG, jnp.float32).at[:, :num_class].set(bl3)

    args = (x.astype(bf16), adj.astype(bf16),
            w1_cat, b1,
            w2_cat, b2,
            wl1.astype(bf16), bl1,
            wl2.astype(bf16), bl2,
            wl3_p.astype(bf16), bl3_p)

    # Advisory cost estimate (7 dots) so XLA can schedule/overlap the tiny call.
    dot_mkn = [
        (n, f_in, 256),    # x @ W1cat
        (n, n, 128),       # A @ (x @ W1_rel)
        (n, n, 128),       # A @ h
        (n, 256, 64),      # [h | A@h] @ W2cat
        (n, 64, 128),      # lin1
        (n, 128, 64),      # lin2
        (n, 64, LANE),     # lin3 (lane padded)
    ]
    flops = sum(2 * m * k * o for (m, k, o) in dot_mkn)
    bytes_accessed = sum(a.size * a.dtype.itemsize for a in args) + n * LANE * 4
    cost = pl.CostEstimate(flops=flops,
                           transcendentals=n * LANE + n,   # exp + log
                           bytes_accessed=bytes_accessed)

    vmem = lambda: pl.BlockSpec(memory_space=pltpu.MemorySpace.VMEM)
    out_padded = pl.pallas_call(
        net_kernel,
        out_shape=jax.ShapeDtypeStruct((n, LANE), jnp.float32),
        in_specs=[vmem() for _ in args],
        out_specs=vmem(),
        cost_estimate=cost,
    )(*args)
    return out_padded[:, :num_class]


def init_params(key, num_feature, num_class):
    """Deterministic synthetic parameters.

    Weights are stored already transposed ([in, out]) so matmuls are plain
    row-major. Biases are [1, out] for clean 2-D broadcasting on TPU.
    """
    dims = [
        ("w1_rel", (num_feature, 128)), ("w1_root", (num_feature, 128)), ("b1", (1, 128)),
        ("w2_rel", (128, 64)), ("w2_root", (128, 64)), ("b2", (1, 64)),
        ("wl1", (64, 128)), ("bl1", (1, 128)),
        ("wl2", (128, 64)), ("bl2", (1, 64)),
        ("wl3", (64, num_class)), ("bl3", (1, num_class)),
    ]
    keys = jax.random.split(key, len(dims))
    params = []
    for k, (_, shape) in zip(keys, dims):
        scale = 1.0 / jnp.sqrt(jnp.float32(shape[0]))
        params.append(jax.random.uniform(k, shape, jnp.float32, -scale, scale))
    return tuple(params)


def reference_forward(x, adj, params):
    """Plain-JAX reference in module order, same bf16-operand/f32-accum precision."""
    (w1r, w1s, b1, w2r, w2s, b2, wl1, bl1, wl2, bl2, wl3, bl3) = params
    d = _mxu_dot
    h = d(d(adj, x), w1r) + b1 + d(x, w1s)
    h = jnp.maximum(h, 0.0)
    h = d(d(adj, h), w2r) + b2 + d(h, w2s)
    h = jnp.maximum(d(h, wl1) + bl1, 0.0)
    h = jnp.maximum(d(h, wl2) + bl2, 0.0)
    logits = d(h, wl3) + bl3
    return jax.nn.log_softmax(logits, axis=-1)


if __name__ == "__main__":
    N = 64            # number of graph nodes
    NUM_FEATURE = 16  # input feature dim
    NUM_CLASS = 8     # output classes

    key = jax.random.PRNGKey(0)
    k_x, k_e, k_p = jax.random.split(key, 3)

    # Node features [N, F_in]
    x = jax.random.normal(k_x, (N, NUM_FEATURE), jnp.float32)

    # Deterministic edge_index: a ring plus a few random chords (COO, [2, E])
    src_ring = jnp.arange(N, dtype=jnp.int32)
    dst_ring = (src_ring + 1) % N
    rnd = jax.random.randint(k_e, (2, 2 * N), 0, N, dtype=jnp.int32)
    edge_index = jnp.concatenate(
        [jnp.stack([src_ring, dst_ring]), jnp.stack([dst_ring, src_ring]), rnd], axis=1)

    # Dense adjacency: A[dst, src] += 1 (multi-edges counted, matching aggr='add')
    adj = jnp.zeros((N, N), jnp.float32).at[edge_index[1], edge_index[0]].add(1.0)

    params = init_params(k_p, NUM_FEATURE, NUM_CLASS)

    out = net_forward(x, adj, params, num_class=NUM_CLASS)
    out = jax.block_until_ready(out)

    ref = reference_forward(x, adj, params)
    assert out.shape == (N, NUM_CLASS)
    # Kernel fuses/reorders the GraphConv matmuls (bf16 operands, f32 accumulation),
    # so allow a small numerical slack vs. the module-order reference.
    assert jnp.allclose(out, ref, atol=5e-2, rtol=5e-2), "mismatch vs. reference"
    assert jnp.all(jnp.isfinite(out)), "non-finite outputs"

    print("KERNEL_OK")
</pallas_src>

<mosaic_0001>
module attributes {stable_mosaic.version = 11 : i64} {
  func.func @net_kernel(%arg0: memref<64x16xbf16, #tpu.memory_space<vmem>>, %arg1: memref<64x64xbf16, #tpu.memory_space<vmem>>, %arg2: memref<16x256xbf16, #tpu.memory_space<vmem>>, %arg3: memref<1x128xf32, #tpu.memory_space<vmem>>, %arg4: memref<256x64xbf16, #tpu.memory_space<vmem>>, %arg5: memref<1x64xf32, #tpu.memory_space<vmem>>, %arg6: memref<64x128xbf16, #tpu.memory_space<vmem>>, %arg7: memref<1x128xf32, #tpu.memory_space<vmem>>, %arg8: memref<128x64xbf16, #tpu.memory_space<vmem>>, %arg9: memref<1x64xf32, #tpu.memory_space<vmem>>, %arg10: memref<64x128xbf16, #tpu.memory_space<vmem>>, %arg11: memref<1x128xf32, #tpu.memory_space<vmem>>, %arg12: memref<64x128xf32, #tpu.memory_space<vmem>>) attributes {dimension_semantics = [], scalar_prefetch = 0 : i64, scratch_operands = 0 : i64, tpu.core_type = #tpu.core_type<tc>} {
    %c0 = arith.constant 0 : index
    %c0_0 = arith.constant 0 : index
    %0 = vector.load %arg0[%c0, %c0_0] : memref<64x16xbf16, #tpu.memory_space<vmem>>, vector<64x16xbf16>
    %c0_1 = arith.constant 0 : index
    %c0_2 = arith.constant 0 : index
    %1 = vector.load %arg1[%c0_1, %c0_2] : memref<64x64xbf16, #tpu.memory_space<vmem>>, vector<64x64xbf16>
    %c0_3 = arith.constant 0 : index
    %c0_4 = arith.constant 0 : index
    %2 = vector.load %arg2[%c0_3, %c0_4] : memref<16x256xbf16, #tpu.memory_space<vmem>>, vector<16x256xbf16>
    %cst = arith.constant dense<0.000000e+00> : vector<64x256xf32>
    %3 = tpu.matmul %0, %2, %cst {dimension_numbers = #tpu.dot_dimension_numbers<[1], [0], [0], [1], [0, 0, 1, 1], [], []>} : vector<64x16xbf16>, vector<16x256xbf16>, vector<64x256xf32> -> vector<64x256xf32>
    %4 = vector.extract_strided_slice %3 {offsets = [0, 0], sizes = [64, 128], strides = [1, 1]} : vector<64x256xf32> to vector<64x128xf32>
    %5 = vector.extract_strided_slice %3 {offsets = [0, 128], sizes = [64, 128], strides = [1, 1]} : vector<64x256xf32> to vector<64x128xf32>
    %6 = arith.truncf %5 : vector<64x128xf32> to vector<64x128xbf16>
    %cst_5 = arith.constant dense<0.000000e+00> : vector<64x128xf32>
    %7 = tpu.matmul %1, %6, %cst_5 {dimension_numbers = #tpu.dot_dimension_numbers<[1], [0], [0], [1], [0, 0, 1, 1], [], []>} : vector<64x64xbf16>, vector<64x128xbf16>, vector<64x128xf32> -> vector<64x128xf32>
    %8 = arith.addf %4, %7 : vector<64x128xf32>
    %c0_6 = arith.constant 0 : index
    %c0_7 = arith.constant 0 : index
    %9 = vector.load %arg3[%c0_6, %c0_7] : memref<1x128xf32, #tpu.memory_space<vmem>>, vector<1x128xf32>
    %10 = vector.broadcast %9 : vector<1x128xf32> to vector<64x128xf32>
    %11 = arith.addf %8, %10 : vector<64x128xf32>
    %cst_8 = arith.constant 0.000000e+00 : f32
    %12 = vector.broadcast %cst_8 : f32 to vector<64x128xf32>
    %13 = arith.maximumf %11, %12 : vector<64x128xf32>
    %14 = arith.truncf %13 : vector<64x128xf32> to vector<64x128xbf16>
    %cst_9 = arith.constant dense<0.000000e+00> : vector<64x128xf32>
    %15 = tpu.matmul %1, %14, %cst_9 {dimension_numbers = #tpu.dot_dimension_numbers<[1], [0], [0], [1], [0, 0, 1, 1], [], []>} : vector<64x64xbf16>, vector<64x128xbf16>, vector<64x128xf32> -> vector<64x128xf32>
    %16 = arith.truncf %15 : vector<64x128xf32> to vector<64x128xbf16>
    %17 = tpu.concatenate %14, %16 in 1 : vector<64x128xbf16>, vector<64x128xbf16> -> vector<64x256xbf16>
    %c0_10 = arith.constant 0 : index
    %c0_11 = arith.constant 0 : index
    %18 = vector.load %arg4[%c0_10, %c0_11] : memref<256x64xbf16, #tpu.memory_space<vmem>>, vector<256x64xbf16>
    %cst_12 = arith.constant dense<0.000000e+00> : vector<64x64xf32>
    %19 = tpu.matmul %17, %18, %cst_12 {dimension_numbers = #tpu.dot_dimension_numbers<[1], [0], [0], [1], [0, 0, 1, 1], [], []>} : vector<64x256xbf16>, vector<256x64xbf16>, vector<64x64xf32> -> vector<64x64xf32>
    %c0_13 = arith.constant 0 : index
    %c0_14 = arith.constant 0 : index
    %20 = vector.load %arg5[%c0_13, %c0_14] : memref<1x64xf32, #tpu.memory_space<vmem>>, vector<1x64xf32>
    %21 = vector.broadcast %20 : vector<1x64xf32> to vector<64x64xf32>
    %22 = arith.addf %19, %21 : vector<64x64xf32>
    %c0_15 = arith.constant 0 : index
    %c0_16 = arith.constant 0 : index
    %23 = vector.load %arg6[%c0_15, %c0_16] : memref<64x128xbf16, #tpu.memory_space<vmem>>, vector<64x128xbf16>
    %24 = arith.truncf %22 : vector<64x64xf32> to vector<64x64xbf16>
    %cst_17 = arith.constant dense<0.000000e+00> : vector<64x128xf32>
    %25 = tpu.matmul %24, %23, %cst_17 {dimension_numbers = #tpu.dot_dimension_numbers<[1], [0], [0], [1], [0, 0, 1, 1], [], []>} : vector<64x64xbf16>, vector<64x128xbf16>, vector<64x128xf32> -> vector<64x128xf32>
    %c0_18 = arith.constant 0 : index
    %c0_19 = arith.constant 0 : index
    %26 = vector.load %arg7[%c0_18, %c0_19] : memref<1x128xf32, #tpu.memory_space<vmem>>, vector<1x128xf32>
    %27 = vector.broadcast %26 : vector<1x128xf32> to vector<64x128xf32>
    %28 = arith.addf %25, %27 : vector<64x128xf32>
    %cst_20 = arith.constant 0.000000e+00 : f32
    %29 = vector.broadcast %cst_20 : f32 to vector<64x128xf32>
    %30 = arith.maximumf %28, %29 : vector<64x128xf32>
    %c0_21 = arith.constant 0 : index
    %c0_22 = arith.constant 0 : index
    %31 = vector.load %arg8[%c0_21, %c0_22] : memref<128x64xbf16, #tpu.memory_space<vmem>>, vector<128x64xbf16>
    %32 = arith.truncf %30 : vector<64x128xf32> to vector<64x128xbf16>
    %cst_23 = arith.constant dense<0.000000e+00> : vector<64x64xf32>
    %33 = tpu.matmul %32, %31, %cst_23 {dimension_numbers = #tpu.dot_dimension_numbers<[1], [0], [0], [1], [0, 0, 1, 1], [], []>} : vector<64x128xbf16>, vector<128x64xbf16>, vector<64x64xf32> -> vector<64x64xf32>
    %c0_24 = arith.constant 0 : index
    %c0_25 = arith.constant 0 : index
    %34 = vector.load %arg9[%c0_24, %c0_25] : memref<1x64xf32, #tpu.memory_space<vmem>>, vector<1x64xf32>
    %35 = vector.broadcast %34 : vector<1x64xf32> to vector<64x64xf32>
    %36 = arith.addf %33, %35 : vector<64x64xf32>
    %cst_26 = arith.constant 0.000000e+00 : f32
    %37 = vector.broadcast %cst_26 : f32 to vector<64x64xf32>
    %38 = arith.maximumf %36, %37 : vector<64x64xf32>
    %c0_27 = arith.constant 0 : index
    %c0_28 = arith.constant 0 : index
    %39 = vector.load %arg10[%c0_27, %c0_28] : memref<64x128xbf16, #tpu.memory_space<vmem>>, vector<64x128xbf16>
    %40 = arith.truncf %38 : vector<64x64xf32> to vector<64x64xbf16>
    %cst_29 = arith.constant dense<0.000000e+00> : vector<64x128xf32>
    %41 = tpu.matmul %40, %39, %cst_29 {dimension_numbers = #tpu.dot_dimension_numbers<[1], [0], [0], [1], [0, 0, 1, 1], [], []>} : vector<64x64xbf16>, vector<64x128xbf16>, vector<64x128xf32> -> vector<64x128xf32>
    %c0_30 = arith.constant 0 : index
    %c0_31 = arith.constant 0 : index
    %42 = vector.load %arg11[%c0_30, %c0_31] : memref<1x128xf32, #tpu.memory_space<vmem>>, vector<1x128xf32>
    %43 = vector.broadcast %42 : vector<1x128xf32> to vector<64x128xf32>
    %44 = arith.addf %41, %43 : vector<64x128xf32>
    %cst_32 = arith.constant dense<0xFF800000> : vector<64xf32>
    %45 = vector.multi_reduction <maximumf>, %44, %cst_32 [1] : vector<64x128xf32> to vector<64xf32>
    %46 = vector.shape_cast %45 : vector<64xf32> to vector<64x1xf32>
    %47 = vector.broadcast %46 : vector<64x1xf32> to vector<64x128xf32>
    %48 = arith.subf %44, %47 : vector<64x128xf32>
    %49 = math.exp %48 : vector<64x128xf32>
    %cst_33 = arith.constant dense<0.000000e+00> : vector<64xf32>
    %50 = vector.multi_reduction <add>, %49, %cst_33 [1] : vector<64x128xf32> to vector<64xf32>
    %51 = vector.shape_cast %50 : vector<64xf32> to vector<64x1xf32>
    %52 = math.log %51 : vector<64x1xf32>
    %53 = vector.broadcast %52 : vector<64x1xf32> to vector<64x128xf32>
    %54 = arith.subf %48, %53 : vector<64x128xf32>
    %c0_34 = arith.constant 0 : index
    %c0_35 = arith.constant 0 : index
    %55 = vector.load %arg12[%c0_34, %c0_35] : memref<64x128xf32, #tpu.memory_space<vmem>>, vector<64x128xf32>
    tpu.vector_store %arg12[%c0_34, %c0_35], %54 {strides = array<i32>} : memref<64x128xf32, #tpu.memory_space<vmem>>, vector<64x128xf32>,
    return
  }
}

</mosaic_0001>

<llo_original>
// kernel: net_forward.1
$region0: #{net_forward.1}
  #allocation0 [shape = 'u32[]', space=smem, size = 0x4, offset = 0x4, fixed_abs, tag = 'smem constant byte address 0x4 - core index']
  #allocation1 [shape = 'u32[72,128]{1,0:T(1,128)}', space=vmem, size = 0x9000, scoped, tag = 'internal scratch']
  %s0 = inlined_call_operand.vmem [shape: bf16[64,16], index: 0, kind: input, shape index: {}]
  %s1 = inlined_call_operand.vmem [shape: bf16[64,64], index: 1, kind: input, shape index: {}]
  %s2 = inlined_call_operand.vmem [shape: bf16[16,256], index: 2, kind: input, shape index: {}]
  %s3 = inlined_call_operand.vmem [shape: f32[1,128], index: 3, kind: input, shape index: {}]
  %s4 = inlined_call_operand.vmem [shape: bf16[256,64], index: 4, kind: input, shape index: {}]
  %s5 = inlined_call_operand.vmem [shape: f32[1,64], index: 5, kind: input, shape index: {}]
  %s6 = inlined_call_operand.vmem [shape: bf16[64,128], index: 6, kind: input, shape index: {}]
  %s7 = inlined_call_operand.vmem [shape: f32[1,128], index: 7, kind: input, shape index: {}]
  %s8 = inlined_call_operand.vmem [shape: bf16[128,64], index: 8, kind: input, shape index: {}]
  %s9 = inlined_call_operand.vmem [shape: f32[1,64], index: 9, kind: input, shape index: {}]
  %s10 = inlined_call_operand.vmem [shape: bf16[64,128], index: 10, kind: input, shape index: {}]
  %s11 = inlined_call_operand.vmem [shape: f32[1,128], index: 11, kind: input, shape index: {}]
  %s12 = inlined_call_operand.vmem [shape: f32[64,128], index: 12, kind: output, shape index: {}]
  %s13 = sld [smem:[#allocation0]]
  $region58: #{net_forward.1} parent=0
    _
  %s15 = ssub.s32 1, %s13
  %s16 = scalar_select 0, %s15, %s13
  // Predicated region
  $region2: #{net_forward.1} parent=0 // pred_check
    _
  $region3: #{net_forward.1} parent=0 // pred_check_branch
    %18 = sbr.rel (0) target = $region5
  $region4: #{net_forward.1} parent=0 // pred_region
    _
  $region5: #{net_forward.1} parent=0 // pred_fallthru
    _
  // Predicated region
  $region6: #{net_forward.1} parent=0 // pred_check
    _
  $region7: #{net_forward.1} parent=0 // pred_check_branch
    %20 = sbr.rel (0) target = $region9
  $region8: #{net_forward.1} parent=0 // pred_region
    _
  $region9: #{net_forward.1} parent=0 // pred_fallthru
    _
  // Predicated region
  $region10: #{net_forward.1} parent=0 // pred_check
    _
  $region11: #{net_forward.1} parent=0 // pred_check_branch
    %22 = sbr.rel (0) target = $region13
  $region12: #{net_forward.1} parent=0 // pred_region
    _
  $region13: #{net_forward.1} parent=0 // pred_fallthru
    _
  // Predicated region
  $region14: #{net_forward.1} parent=0 // pred_check
    _
  $region15: #{net_forward.1} parent=0 // pred_check_branch
    %24 = sbr.rel (0) target = $region17
  $region16: #{net_forward.1} parent=0 // pred_region
    _
  $region17: #{net_forward.1} parent=0 // pred_fallthru
    _
  // Predicated region
  $region18: #{net_forward.1} parent=0 // pred_check
    _
  $region19: #{net_forward.1} parent=0 // pred_check_branch
    %26 = sbr.rel (0) target = $region21
  $region20: #{net_forward.1} parent=0 // pred_region
    _
  $region21: #{net_forward.1} parent=0 // pred_fallthru
    _
  // Predicated region
  $region22: #{net_forward.1} parent=0 // pred_check
    _
  $region23: #{net_forward.1} parent=0 // pred_check_branch
    %28 = sbr.rel (0) target = $region25
  $region24: #{net_forward.1} parent=0 // pred_region
    _
  $region25: #{net_forward.1} parent=0 // pred_fallthru
    _
  // Predicated region
  $region26: #{net_forward.1} parent=0 // pred_check
    _
  $region27: #{net_forward.1} parent=0 // pred_check_branch
    %30 = sbr.rel (0) target = $region29
  $region28: #{net_forward.1} parent=0 // pred_region
    _
  $region29: #{net_forward.1} parent=0 // pred_fallthru
    _
  // Predicated region
  $region30: #{net_forward.1} parent=0 // pred_check
    _
  $region31: #{net_forward.1} parent=0 // pred_check_branch
    %32 = sbr.rel (0) target = $region33
  $region32: #{net_forward.1} parent=0 // pred_region
    _
  $region33: #{net_forward.1} parent=0 // pred_fallthru
    _
  // Predicated region
  $region34: #{net_forward.1} parent=0 // pred_check
    _
  $region35: #{net_forward.1} parent=0 // pred_check_branch
    %34 = sbr.rel (0) target = $region37
  $region36: #{net_forward.1} parent=0 // pred_region
    _
  $region37: #{net_forward.1} parent=0 // pred_fallthru
    _
  // Predicated region
  $region38: #{net_forward.1} parent=0 // pred_check
    _
  $region39: #{net_forward.1} parent=0 // pred_check_branch
    %36 = sbr.rel (0) target = $region41
  $region40: #{net_forward.1} parent=0 // pred_region
    _
  $region41: #{net_forward.1} parent=0 // pred_fallthru
    _
  // Predicated region
  $region42: #{net_forward.1} parent=0 // pred_check
    _
  $region43: #{net_forward.1} parent=0 // pred_check_branch
    %38 = sbr.rel (0) target = $region45
  $region44: #{net_forward.1} parent=0 // pred_region
    _
  $region45: #{net_forward.1} parent=0 // pred_fallthru
    _
  // Predicated region
  $region46: #{net_forward.1} parent=0 // pred_check
    _
  $region47: #{net_forward.1} parent=0 // pred_check_branch
    %40 = sbr.rel (0) target = $region49
  $region48: #{net_forward.1} parent=0 // pred_region
    _
  $region49: #{net_forward.1} parent=0 // pred_fallthru
    _
  %v42 = vld [vmem:[%s0] sm:$0xf]
  %v43 = vld [vmem:[%s0 + $0x4] sm:$0xf]
  %v44 = vld [vmem:[%s0 + $0x8] sm:$0xf]
  %v45 = vld [vmem:[%s0 + $0xc] sm:$0xf]
  %v46 = vld [vmem:[%s0 + $0x10] sm:$0xf]
  %v47 = vld [vmem:[%s0 + $0x14] sm:$0xf]
  %v48 = vld [vmem:[%s0 + $0x18] sm:$0xf]
  %v49 = vld [vmem:[%s0 + $0x1c] sm:$0xf]
  %v50 = vld [vmem:[%s1] sm:$0xf]
  %v51 = vld [vmem:[%s1 + $0x4] sm:$0xf]
  %v52 = vld [vmem:[%s1 + $0x8] sm:$0xf]
  %v53 = vld [vmem:[%s1 + $0xc] sm:$0xf]
  %v54 = vld [vmem:[%s1 + $0x10] sm:$0xf]
  %v55 = vld [vmem:[%s1 + $0x14] sm:$0xf]
  %v56 = vld [vmem:[%s1 + $0x18] sm:$0xf]
  %v57 = vld [vmem:[%s1 + $0x1c] sm:$0xf]
  %v58 = vld [vmem:[%s2] sm:$0xff]
  %v59 = vld [vmem:[%s2 + $0x8] sm:$0xff]
  %v68 = vunpack.c.l.b16 %v42
  %v69 = vunpack.c.l.b16 %v43
  %v70 = vunpack.c.l.b16 %v44
  %v71 = vunpack.c.l.b16 %v45
  %v72 = vunpack.c.l.b16 %v46
  %v73 = vunpack.c.l.b16 %v47
  %v74 = vunpack.c.l.b16 %v48
  %v75 = vunpack.c.l.b16 %v49
  %v76 = vpack.c.b16 %v69, %v68
  %v77 = vpack.c.b16 %v71, %v70
  %v78 = vpack.c.b16 %v73, %v72
  %v79 = vpack.c.b16 %v75, %v74
  %v82 = vunpack.c.l.b16 %v58
  %v83 = vunpack.c.h.b16 %v58
  %v84 = vunpack.c.l.b16 %v59
  %v85 = vunpack.c.h.b16 %v59
  %v86 = vpack.c.b16 %v84, %v82
  %v87 = vpack.c.b16 %v85, %v83
  %vm90 = vcmask 130048
  %v92 = vsel %vm90, %v76, 0
  %v95 = vsel %vm90, %v77, 0
  %v98 = vsel %vm90, %v78, 0
  %v101 = vsel %vm90, %v79, 0
  %103 = vmatpush.bf16.msra.mxu0 0
  %104 = vmatpush.bf16.msra.mxu0 0
  %105 = vmatpush.bf16.msra.mxu0 0
  %106 = vmatpush.bf16.msra.mxu0 0
  %107 = vmatpush.bf16.msra.mxu0 0
  %108 = vmatpush.bf16.msra.mxu0 0
  %109 = vmatpush.bf16.msra.mxu0 0
  %110 = vmatpush.bf16.msra.mxu0 %v86
  %111 = vmatmul.bf16.gmra.mxu0 %v92
  %v112 = vpop.f32.mrf.mxu0
  %v113 = vadd.f32 0.0, %v112
  %v114 = vpop.f32.mrf.mxu0
  %v115 = vadd.f32 0.0, %v114
  %116 = vmatmul.bf16.gmra.mxu0 %v95
  %v117 = vpop.f32.mrf.mxu0
  %v118 = vadd.f32 0.0, %v117
  %v119 = vpop.f32.mrf.mxu0
  %v120 = vadd.f32 0.0, %v119
  %121 = vmatmul.bf16.gmra.mxu0 %v98
  %v122 = vpop.f32.mrf.mxu0
  %v123 = vadd.f32 0.0, %v122
  %v124 = vpop.f32.mrf.mxu0
  %v125 = vadd.f32 0.0, %v124
  %126 = vmatmul.bf16.gmra.mxu0 %v101
  %v127 = vpop.f32.mrf.mxu0
  %v128 = vadd.f32 0.0, %v127
  %v129 = vpop.f32.mrf.mxu0
  %v130 = vadd.f32 0.0, %v129
  %131 = vdwg.mxu0
  %132 = vmatpush.bf16.msra.mxu0 0
  %133 = vmatpush.bf16.msra.mxu0 0
  %134 = vmatpush.bf16.msra.mxu0 0
  %135 = vmatpush.bf16.msra.mxu0 0
  %136 = vmatpush.bf16.msra.mxu0 0
  %137 = vmatpush.bf16.msra.mxu0 0
  %138 = vmatpush.bf16.msra.mxu0 0
  %139 = vmatpush.bf16.msra.mxu0 %v87
  %140 = vmatmul.bf16.gmra.mxu0 %v92
  %v141 = vpop.f32.mrf.mxu0
  %v142 = vadd.f32 0.0, %v141
  %v143 = vpop.f32.mrf.mxu0
  %v144 = vadd.f32 0.0, %v143
  %145 = vmatmul.bf16.gmra.mxu0 %v95
  %v146 = vpop.f32.mrf.mxu0
  %v147 = vadd.f32 0.0, %v146
  %v148 = vpop.f32.mrf.mxu0
  %v149 = vadd.f32 0.0, %v148
  %150 = vmatmul.bf16.gmra.mxu0 %v98
  %v151 = vpop.f32.mrf.mxu0
  %v152 = vadd.f32 0.0, %v151
  %v153 = vpop.f32.mrf.mxu0
  %v154 = vadd.f32 0.0, %v153
  %155 = vmatmul.bf16.gmra.mxu0 %v101
  %v156 = vpop.f32.mrf.mxu0
  %v157 = vadd.f32 0.0, %v156
  %v158 = vpop.f32.mrf.mxu0
  %v159 = vadd.f32 0.0, %v158
  %160 = vdwg.mxu0
  %v161 = vpack.c.bf16 %v144, %v142
  %v162 = vpack.c.bf16 %v149, %v147
  %v163 = vpack.c.bf16 %v154, %v152
  %v164 = vpack.c.bf16 %v159, %v157
  %v173 = vunpack.c.l.b16 %v50
  %v174 = vunpack.c.l.b16 %v51
  %v175 = vunpack.c.l.b16 %v52
  %v176 = vunpack.c.l.b16 %v53
  %v177 = vunpack.c.l.b16 %v54
  %v178 = vunpack.c.l.b16 %v55
  %v179 = vunpack.c.l.b16 %v56
  %v180 = vunpack.c.l.b16 %v57
  %v181 = vpack.c.b16 %v174, %v173
  %v182 = vpack.c.b16 %v176, %v175
  %v183 = vpack.c.b16 %v178, %v177
  %v184 = vpack.c.b16 %v180, %v179
  %vm185 = vcmask 523264
  %v187 = vsel %vm185, %v181, 0
  %v190 = vsel %vm185, %v182, 0
  %v193 = vsel %vm185, %v183, 0
  %v196 = vsel %vm185, %v184, 0
  %198 = vmatpush.bf16.msra.mxu0 0
  %199 = vmatpush.bf16.msra.mxu0 0
  %200 = vmatpush.bf16.msra.mxu0 0
  %201 = vmatpush.bf16.msra.mxu0 0
  %202 = vmatpush.bf16.msra.mxu0 %v164
  %203 = vmatpush.bf16.msra.mxu0 %v163
  %204 = vmatpush.bf16.msra.mxu0 %v162
  %205 = vmatpush.bf16.msra.mxu0 %v161
  %206 = vmatmul.bf16.gmra.mxu0 %v187
  %v207 = vpop.f32.mrf.mxu0
  %v208 = vadd.f32 0.0, %v207
  %v209 = vpop.f32.mrf.mxu0
  %v210 = vadd.f32 0.0, %v209
  %211 = vmatmul.bf16.gmra.mxu0 %v190
  %v212 = vpop.f32.mrf.mxu0
  %v213 = vadd.f32 0.0, %v212
  %v214 = vpop.f32.mrf.mxu0
  %v215 = vadd.f32 0.0, %v214
  %216 = vmatmul.bf16.gmra.mxu0 %v193
  %v217 = vpop.f32.mrf.mxu0
  %v218 = vadd.f32 0.0, %v217
  %v219 = vpop.f32.mrf.mxu0
  %v220 = vadd.f32 0.0, %v219
  %221 = vmatmul.bf16.gmra.mxu0 %v196
  %v222 = vpop.f32.mrf.mxu0
  %v223 = vadd.f32 0.0, %v222
  %v224 = vpop.f32.mrf.mxu0
  %v225 = vadd.f32 0.0, %v224
  %226 = vdwg.mxu0
  %v227 = vadd.f32 %v113, %v208
  %v228 = vadd.f32 %v115, %v210
  %v229 = vadd.f32 %v118, %v213
  %v230 = vadd.f32 %v120, %v215
  %v231 = vadd.f32 %v123, %v218
  %v232 = vadd.f32 %v125, %v220
  %v233 = vadd.f32 %v128, %v223
  %v234 = vadd.f32 %v130, %v225
  %v235 = vld [vmem:[%s3] sm:$0x1]
  %v237 = vperm.slane %v235, 0
  %v239 = vadd.f32 %v227, %v237
  %v240 = vadd.f32 %v228, %v237
  %v241 = vadd.f32 %v229, %v237
  %v242 = vadd.f32 %v230, %v237
  %v243 = vadd.f32 %v231, %v237
  %v244 = vadd.f32 %v232, %v237
  %v245 = vadd.f32 %v233, %v237
  %v246 = vadd.f32 %v234, %v237
  %v247 = vmax.f32 %v239, 0.0
  %v248 = vmax.f32 %v240, 0.0
  %v249 = vmax.f32 %v241, 0.0
  %v250 = vmax.f32 %v242, 0.0
  %v251 = vmax.f32 %v243, 0.0
  %v252 = vmax.f32 %v244, 0.0
  %v253 = vmax.f32 %v245, 0.0
  %v254 = vmax.f32 %v246, 0.0
  %v255 = vpack.c.bf16 %v247, %v247
  %v256 = vpack.c.bf16 %v248, %v248
  %v257 = vpack.c.bf16 %v249, %v249
  %v258 = vpack.c.bf16 %v250, %v250
  %v259 = vpack.c.bf16 %v251, %v251
  %v260 = vpack.c.bf16 %v252, %v252
  %v261 = vpack.c.bf16 %v253, %v253
  %v262 = vpack.c.bf16 %v254, %v254
  %v271 = vunpack.c.l.b16 %v255
  %v272 = vunpack.c.l.b16 %v256
  %v273 = vunpack.c.l.b16 %v257
  %v274 = vunpack.c.l.b16 %v258
  %v275 = vunpack.c.l.b16 %v259
  %v276 = vunpack.c.l.b16 %v260
  %v277 = vunpack.c.l.b16 %v261
  %v278 = vunpack.c.l.b16 %v262
  %v279 = vpack.c.b16 %v272, %v271
  %v280 = vpack.c.b16 %v274, %v273
  %v281 = vpack.c.b16 %v276, %v275
  %v282 = vpack.c.b16 %v278, %v277
  %287 = vmatpush.bf16.msra.mxu0 0
  %288 = vmatpush.bf16.msra.mxu0 0
  %289 = vmatpush.bf16.msra.mxu0 0
  %290 = vmatpush.bf16.msra.mxu0 0
  %291 = vmatpush.bf16.msra.mxu0 %v282
  %292 = vmatpush.bf16.msra.mxu0 %v281
  %293 = vmatpush.bf16.msra.mxu0 %v280
  %294 = vmatpush.bf16.msra.mxu0 %v279
  %295 = vmatmul.bf16.gmra.mxu0 %v187
  %v296 = vpop.f32.mrf.mxu0
  %v297 = vadd.f32 0.0, %v296
  %v298 = vpop.f32.mrf.mxu0
  %v299 = vadd.f32 0.0, %v298
  %300 = vmatmul.bf16.gmra.mxu0 %v190
  %v301 = vpop.f32.mrf.mxu0
  %v302 = vadd.f32 0.0, %v301
  %v303 = vpop.f32.mrf.mxu0
  %v304 = vadd.f32 0.0, %v303
  %305 = vmatmul.bf16.gmra.mxu0 %v193
  %v306 = vpop.f32.mrf.mxu0
  %v307 = vadd.f32 0.0, %v306
  %v308 = vpop.f32.mrf.mxu0
  %v309 = vadd.f32 0.0, %v308
  %310 = vmatmul.bf16.gmra.mxu0 %v196
  %v311 = vpop.f32.mrf.mxu0
  %v312 = vadd.f32 0.0, %v311
  %v313 = vpop.f32.mrf.mxu0
  %v314 = vadd.f32 0.0, %v313
  %315 = vdwg.mxu0
  %v316 = vpack.c.bf16 %v297, %v297
  %v317 = vpack.c.bf16 %v299, %v299
  %v318 = vpack.c.bf16 %v302, %v302
  %v319 = vpack.c.bf16 %v304, %v304
  %v320 = vpack.c.bf16 %v307, %v307
  %v321 = vpack.c.bf16 %v309, %v309
  %v322 = vpack.c.bf16 %v312, %v312
  %v323 = vpack.c.bf16 %v314, %v314
  %v332 = vunpack.c.l.b16 %v316
  %v333 = vunpack.c.l.b16 %v317
  %v334 = vunpack.c.l.b16 %v318
  %v335 = vunpack.c.l.b16 %v319
  %v336 = vunpack.c.l.b16 %v320
  %v337 = vunpack.c.l.b16 %v321
  %v338 = vunpack.c.l.b16 %v322
  %v339 = vunpack.c.l.b16 %v323
  %v340 = vpack.c.b16 %v333, %v332
  %v341 = vpack.c.b16 %v335, %v334
  %v342 = vpack.c.b16 %v337, %v336
  %v343 = vpack.c.b16 %v339, %v338
  %v348 = vld [vmem:[%s4] sm:$0xf]
  %v349 = vld [vmem:[%s4 + $0x4] sm:$0xf]
  %v350 = vld [vmem:[%s4 + $0x8] sm:$0xf]
  %v351 = vld [vmem:[%s4 + $0xc] sm:$0xf]
  %v352 = vld [vmem:[%s4 + $0x10] sm:$0xf]
  %v353 = vld [vmem:[%s4 + $0x14] sm:$0xf]
  %v354 = vld [vmem:[%s4 + $0x18] sm:$0xf]
  %v355 = vld [vmem:[%s4 + $0x1c] sm:$0xf]
  %v356 = vld [vmem:[%s4 + $0x20] sm:$0xf]
  %v357 = vld [vmem:[%s4 + $0x24] sm:$0xf]
  %v358 = vld [vmem:[%s4 + $0x28] sm:$0xf]
  %v359 = vld [vmem:[%s4 + $0x2c] sm:$0xf]
  %v360 = vld [vmem:[%s4 + $0x30] sm:$0xf]
  %v361 = vld [vmem:[%s4 + $0x34] sm:$0xf]
  %v362 = vld [vmem:[%s4 + $0x38] sm:$0xf]
  %v363 = vld [vmem:[%s4 + $0x3c] sm:$0xf]
  %v364 = vld [vmem:[%s4 + $0x40] sm:$0xf]
  %v365 = vld [vmem:[%s4 + $0x44] sm:$0xf]
  %v366 = vld [vmem:[%s4 + $0x48] sm:$0xf]
  %v367 = vld [vmem:[%s4 + $0x4c] sm:$0xf]
  %v368 = vld [vmem:[%s4 + $0x50] sm:$0xf]
  %v369 = vld [vmem:[%s4 + $0x54] sm:$0xf]
  %v370 = vld [vmem:[%s4 + $0x58] sm:$0xf]
  %v371 = vld [vmem:[%s4 + $0x5c] sm:$0xf]
  %v372 = vld [vmem:[%s4 + $0x60] sm:$0xf]
  %v373 = vld [vmem:[%s4 + $0x64] sm:$0xf]
  %v374 = vld [vmem:[%s4 + $0x68] sm:$0xf]
  %v375 = vld [vmem:[%s4 + $0x6c] sm:$0xf]
  %v376 = vld [vmem:[%s4 + $0x70] sm:$0xf]
  %v377 = vld [vmem:[%s4 + $0x74] sm:$0xf]
  %v378 = vld [vmem:[%s4 + $0x78] sm:$0xf]
  %v379 = vld [vmem:[%s4 + $0x7c] sm:$0xf]
  %v380 = vld [vmem:[%s5] sm:$0x1]
  %v382 = vperm.slane %v380, 0
  %v416 = vunpack.c.l.b16 %v348
  %v417 = vunpack.c.l.b16 %v349
  %v418 = vunpack.c.l.b16 %v350
  %v419 = vunpack.c.l.b16 %v351
  %v420 = vunpack.c.l.b16 %v352
  %v421 = vunpack.c.l.b16 %v353
  %v422 = vunpack.c.l.b16 %v354
  %v423 = vunpack.c.l.b16 %v355
  %v424 = vunpack.c.l.b16 %v356
  %v425 = vunpack.c.l.b16 %v357
  %v426 = vunpack.c.l.b16 %v358
  %v427 = vunpack.c.l.b16 %v359
  %v428 = vunpack.c.l.b16 %v360
  %v429 = vunpack.c.l.b16 %v361
  %v430 = vunpack.c.l.b16 %v362
  %v431 = vunpack.c.l.b16 %v363
  %v432 = vunpack.c.l.b16 %v364
  %v433 = vunpack.c.l.b16 %v365
  %v434 = vunpack.c.l.b16 %v366
  %v435 = vunpack.c.l.b16 %v367
  %v436 = vunpack.c.l.b16 %v368
  %v437 = vunpack.c.l.b16 %v369
  %v438 = vunpack.c.l.b16 %v370
  %v439 = vunpack.c.l.b16 %v371
  %v440 = vunpack.c.l.b16 %v372
  %v441 = vunpack.c.l.b16 %v373
  %v442 = vunpack.c.l.b16 %v374
  %v443 = vunpack.c.l.b16 %v375
  %v444 = vunpack.c.l.b16 %v376
  %v445 = vunpack.c.l.b16 %v377
  %v446 = vunpack.c.l.b16 %v378
  %v447 = vunpack.c.l.b16 %v379
  %v448 = vpack.c.b16 %v417, %v416
  %v449 = vpack.c.b16 %v419, %v418
  %v450 = vpack.c.b16 %v421, %v420
  %v451 = vpack.c.b16 %v423, %v422
  %v452 = vpack.c.b16 %v425, %v424
  %v453 = vpack.c.b16 %v427, %v426
  %v454 = vpack.c.b16 %v429, %v428
  %v455 = vpack.c.b16 %v431, %v430
  %v456 = vpack.c.b16 %v433, %v432
  %v457 = vpack.c.b16 %v435, %v434
  %v458 = vpack.c.b16 %v437, %v436
  %v459 = vpack.c.b16 %v439, %v438
  %v460 = vpack.c.b16 %v441, %v440
  %v461 = vpack.c.b16 %v443, %v442
  %v462 = vpack.c.b16 %v445, %v444
  %v463 = vpack.c.b16 %v447, %v446
  %480 = vmatpush.bf16.msra.mxu0 %v455
  %481 = vmatpush.bf16.msra.mxu0 %v454
  %482 = vmatpush.bf16.msra.mxu0 %v453
  %483 = vmatpush.bf16.msra.mxu0 %v452
  %484 = vmatpush.bf16.msra.mxu0 %v451
  %485 = vmatpush.bf16.msra.mxu0 %v450
  %486 = vmatpush.bf16.msra.mxu0 %v449
  %487 = vmatpush.bf16.msra.mxu0 %v448
  %488 = vmatmul.bf16.gmra.mxu0 %v279
  %v489 = vpop.f32.mrf.mxu0
  %v490 = vadd.f32 %v382, %v489
  %v491 = vpop.f32.mrf.mxu0
  %v492 = vadd.f32 %v382, %v491
  %493 = vmatmul.bf16.gmra.mxu0 %v280
  %v494 = vpop.f32.mrf.mxu0
  %v495 = vadd.f32 %v382, %v494
  %v496 = vpop.f32.mrf.mxu0
  %v497 = vadd.f32 %v382, %v496
  %498 = vmatmul.bf16.gmra.mxu0 %v281
  %v499 = vpop.f32.mrf.mxu0
  %v500 = vadd.f32 %v382, %v499
  %v501 = vpop.f32.mrf.mxu0
  %v502 = vadd.f32 %v382, %v501
  %503 = vmatmul.bf16.gmra.mxu0 %v282
  %v504 = vpop.f32.mrf.mxu0
  %v505 = vadd.f32 %v382, %v504
  %v506 = vpop.f32.mrf.mxu0
  %v507 = vadd.f32 %v382, %v506
  %508 = vdwg.mxu0
  %509 = vmatpush.bf16.msra.mxu0 %v463
  %510 = vmatpush.bf16.msra.mxu0 %v462
  %511 = vmatpush.bf16.msra.mxu0 %v461
  %512 = vmatpush.bf16.msra.mxu0 %v460
  %513 = vmatpush.bf16.msra.mxu0 %v459
  %514 = vmatpush.bf16.msra.mxu0 %v458
  %515 = vmatpush.bf16.msra.mxu0 %v457
  %516 = vmatpush.bf16.msra.mxu0 %v456
  %517 = vmatmul.bf16.gmra.mxu0 %v340
  %v518 = vpop.f32.mrf.mxu0
  %v519 = vadd.f32 %v490, %v518
  %v520 = vpop.f32.mrf.mxu0
  %v521 = vadd.f32 %v492, %v520
  %522 = vmatmul.bf16.gmra.mxu0 %v341
  %v523 = vpop.f32.mrf.mxu0
  %v524 = vadd.f32 %v495, %v523
  %v525 = vpop.f32.mrf.mxu0
  %v526 = vadd.f32 %v497, %v525
  %527 = vmatmul.bf16.gmra.mxu0 %v342
  %v528 = vpop.f32.mrf.mxu0
  %v529 = vadd.f32 %v500, %v528
  %v530 = vpop.f32.mrf.mxu0
  %v531 = vadd.f32 %v502, %v530
  %532 = vmatmul.bf16.gmra.mxu0 %v343
  %v533 = vpop.f32.mrf.mxu0
  %v534 = vadd.f32 %v505, %v533
  %v535 = vpop.f32.mrf.mxu0
  %v536 = vadd.f32 %v507, %v535
  %537 = vdwg.mxu0
  %v538 = vld [vmem:[%s6] sm:$0xf]
  %v539 = vld [vmem:[%s6 + $0x4] sm:$0xf]
  %v540 = vld [vmem:[%s6 + $0x8] sm:$0xf]
  %v541 = vld [vmem:[%s6 + $0xc] sm:$0xf]
  %v542 = vld [vmem:[%s6 + $0x10] sm:$0xf]
  %v543 = vld [vmem:[%s6 + $0x14] sm:$0xf]
  %v544 = vld [vmem:[%s6 + $0x18] sm:$0xf]
  %v545 = vld [vmem:[%s6 + $0x1c] sm:$0xf]
  %v546 = vpack.c.bf16 %v521, %v519
  %v547 = vpack.c.bf16 %v526, %v524
  %v548 = vpack.c.bf16 %v531, %v529
  %v549 = vpack.c.bf16 %v536, %v534
  %v550 = vld [vmem:[%s7] sm:$0x1]
  %v552 = vperm.slane %v550, 0
  %v562 = vunpack.c.l.b16 %v538
  %v563 = vunpack.c.l.b16 %v539
  %v564 = vunpack.c.l.b16 %v540
  %v565 = vunpack.c.l.b16 %v541
  %v566 = vunpack.c.l.b16 %v542
  %v567 = vunpack.c.l.b16 %v543
  %v568 = vunpack.c.l.b16 %v544
  %v569 = vunpack.c.l.b16 %v545
  %v570 = vpack.c.b16 %v563, %v562
  %v571 = vpack.c.b16 %v565, %v564
  %v572 = vpack.c.b16 %v567, %v566
  %v573 = vpack.c.b16 %v569, %v568
  %v579 = vsel %vm185, %v546, 0
  %v582 = vsel %vm185, %v547, 0
  %v585 = vsel %vm185, %v548, 0
  %v588 = vsel %vm185, %v549, 0
  %590 = vmatpush.bf16.msra.mxu0 0
  %591 = vmatpush.bf16.msra.mxu0 0
  %592 = vmatpush.bf16.msra.mxu0 0
  %593 = vmatpush.bf16.msra.mxu0 0
  %594 = vmatpush.bf16.msra.mxu0 %v573
  %595 = vmatpush.bf16.msra.mxu0 %v572
  %596 = vmatpush.bf16.msra.mxu0 %v571
  %597 = vmatpush.bf16.msra.mxu0 %v570
  %598 = vmatmul.bf16.gmra.mxu0 %v579
  %v599 = vpop.f32.mrf.mxu0
  %v600 = vadd.f32 %v552, %v599
  %v601 = vpop.f32.mrf.mxu0
  %v602 = vadd.f32 %v552, %v601
  %603 = vmatmul.bf16.gmra.mxu0 %v582
  %v604 = vpop.f32.mrf.mxu0
  %v605 = vadd.f32 %v552, %v604
  %v606 = vpop.f32.mrf.mxu0
  %v607 = vadd.f32 %v552, %v606
  %608 = vmatmul.bf16.gmra.mxu0 %v585
  %v609 = vpop.f32.mrf.mxu0
  %v610 = vadd.f32 %v552, %v609
  %v611 = vpop.f32.mrf.mxu0
  %v612 = vadd.f32 %v552, %v611
  %613 = vmatmul.bf16.gmra.mxu0 %v588
  %v614 = vpop.f32.mrf.mxu0
  %v615 = vadd.f32 %v552, %v614
  %v616 = vpop.f32.mrf.mxu0
  %v617 = vadd.f32 %v552, %v616
  %618 = vdwg.mxu0
  %v619 = vmax.f32 %v600, 0.0
  %v620 = vmax.f32 %v602, 0.0
  %v621 = vmax.f32 %v605, 0.0
  %v622 = vmax.f32 %v607, 0.0
  %v623 = vmax.f32 %v610, 0.0
  %v624 = vmax.f32 %v612, 0.0
  %v625 = vmax.f32 %v615, 0.0
  %v626 = vmax.f32 %v617, 0.0
  %v627 = vld [vmem:[%s8] sm:$0xf]
  %v628 = vld [vmem:[%s8 + $0x4] sm:$0xf]
  %v629 = vld [vmem:[%s8 + $0x8] sm:$0xf]
  %v630 = vld [vmem:[%s8 + $0xc] sm:$0xf]
  %v631 = vld [vmem:[%s8 + $0x10] sm:$0xf]
  %v632 = vld [vmem:[%s8 + $0x14] sm:$0xf]
  %v633 = vld [vmem:[%s8 + $0x18] sm:$0xf]
  %v634 = vld [vmem:[%s8 + $0x1c] sm:$0xf]
  %v635 = vld [vmem:[%s8 + $0x20] sm:$0xf]
  %v636 = vld [vmem:[%s8 + $0x24] sm:$0xf]
  %v637 = vld [vmem:[%s8 + $0x28] sm:$0xf]
  %v638 = vld [vmem:[%s8 + $0x2c] sm:$0xf]
  %v639 = vld [vmem:[%s8 + $0x30] sm:$0xf]
  %v640 = vld [vmem:[%s8 + $0x34] sm:$0xf]
  %v641 = vld [vmem:[%s8 + $0x38] sm:$0xf]
  %v642 = vld [vmem:[%s8 + $0x3c] sm:$0xf]
  %v643 = vpack.c.bf16 %v620, %v619
  %v644 = vpack.c.bf16 %v622, %v621
  %v645 = vpack.c.bf16 %v624, %v623
  %v646 = vpack.c.bf16 %v626, %v625
  %v647 = vld [vmem:[%s9] sm:$0x1]
  %v649 = vperm.slane %v647, 0
  %v667 = vunpack.c.l.b16 %v627
  %v668 = vunpack.c.l.b16 %v628
  %v669 = vunpack.c.l.b16 %v629
  %v670 = vunpack.c.l.b16 %v630
  %v671 = vunpack.c.l.b16 %v631
  %v672 = vunpack.c.l.b16 %v632
  %v673 = vunpack.c.l.b16 %v633
  %v674 = vunpack.c.l.b16 %v634
  %v675 = vunpack.c.l.b16 %v635
  %v676 = vunpack.c.l.b16 %v636
  %v677 = vunpack.c.l.b16 %v637
  %v678 = vunpack.c.l.b16 %v638
  %v679 = vunpack.c.l.b16 %v639
  %v680 = vunpack.c.l.b16 %v640
  %v681 = vunpack.c.l.b16 %v641
  %v682 = vunpack.c.l.b16 %v642
  %v683 = vpack.c.b16 %v668, %v667
  %v684 = vpack.c.b16 %v670, %v669
  %v685 = vpack.c.b16 %v672, %v671
  %v686 = vpack.c.b16 %v674, %v673
  %v687 = vpack.c.b16 %v676, %v675
  %v688 = vpack.c.b16 %v678, %v677
  %v689 = vpack.c.b16 %v680, %v679
  %v690 = vpack.c.b16 %v682, %v681
  %699 = vmatpush.bf16.msra.mxu0 %v690
  %700 = vmatpush.bf16.msra.mxu0 %v689
  %701 = vmatpush.bf16.msra.mxu0 %v688
  %702 = vmatpush.bf16.msra.mxu0 %v687
  %703 = vmatpush.bf16.msra.mxu0 %v686
  %704 = vmatpush.bf16.msra.mxu0 %v685
  %705 = vmatpush.bf16.msra.mxu0 %v684
  %706 = vmatpush.bf16.msra.mxu0 %v683
  %707 = vmatmul.bf16.gmra.mxu0 %v643
  %v708 = vpop.f32.mrf.mxu0
  %v709 = vadd.f32 %v649, %v708
  %v710 = vpop.f32.mrf.mxu0
  %v711 = vadd.f32 %v649, %v710
  %712 = vmatmul.bf16.gmra.mxu0 %v644
  %v713 = vpop.f32.mrf.mxu0
  %v714 = vadd.f32 %v649, %v713
  %v715 = vpop.f32.mrf.mxu0
  %v716 = vadd.f32 %v649, %v715
  %717 = vmatmul.bf16.gmra.mxu0 %v645
  %v718 = vpop.f32.mrf.mxu0
  %v719 = vadd.f32 %v649, %v718
  %v720 = vpop.f32.mrf.mxu0
  %v721 = vadd.f32 %v649, %v720
  %722 = vmatmul.bf16.gmra.mxu0 %v646
  %v723 = vpop.f32.mrf.mxu0
  %v724 = vadd.f32 %v649, %v723
  %v725 = vpop.f32.mrf.mxu0
  %v726 = vadd.f32 %v649, %v725
  %727 = vdwg.mxu0
  %v728 = vmax.f32 %v709, 0.0
  %v729 = vmax.f32 %v711, 0.0
  %v730 = vmax.f32 %v714, 0.0
  %v731 = vmax.f32 %v716, 0.0
  %v732 = vmax.f32 %v719, 0.0
  %v733 = vmax.f32 %v721, 0.0
  %v734 = vmax.f32 %v724, 0.0
  %v735 = vmax.f32 %v726, 0.0
  %v736 = vld [vmem:[%s10] sm:$0xf]
  %v737 = vld [vmem:[%s10 + $0x4] sm:$0xf]
  %v738 = vld [vmem:[%s10 + $0x8] sm:$0xf]
  %v739 = vld [vmem:[%s10 + $0xc] sm:$0xf]
  %v740 = vld [vmem:[%s10 + $0x10] sm:$0xf]
  %v741 = vld [vmem:[%s10 + $0x14] sm:$0xf]
  %v742 = vld [vmem:[%s10 + $0x18] sm:$0xf]
  %v743 = vld [vmem:[%s10 + $0x1c] sm:$0xf]
  %v744 = vpack.c.bf16 %v729, %v728
  %v745 = vpack.c.bf16 %v731, %v730
  %v746 = vpack.c.bf16 %v733, %v732
  %v747 = vpack.c.bf16 %v735, %v734
  %v748 = vld [vmem:[%s11] sm:$0x1]
  %v750 = vperm.slane %v748, 0
  %v760 = vunpack.c.l.b16 %v736
  %v761 = vunpack.c.l.b16 %v737
  %v762 = vunpack.c.l.b16 %v738
  %v763 = vunpack.c.l.b16 %v739
  %v764 = vunpack.c.l.b16 %v740
  %v765 = vunpack.c.l.b16 %v741
  %v766 = vunpack.c.l.b16 %v742
  %v767 = vunpack.c.l.b16 %v743
  %v768 = vpack.c.b16 %v761, %v760
  %v769 = vpack.c.b16 %v763, %v762
  %v770 = vpack.c.b16 %v765, %v764
  %v771 = vpack.c.b16 %v767, %v766
  %v777 = vsel %vm185, %v744, 0
  %v780 = vsel %vm185, %v745, 0
  %v783 = vsel %vm185, %v746, 0
  %v786 = vsel %vm185, %v747, 0
  %788 = vmatpush.bf16.msra.mxu0 0
  %789 = vmatpush.bf16.msra.mxu0 0
  %790 = vmatpush.bf16.msra.mxu0 0
  %791 = vmatpush.bf16.msra.mxu0 0
  %792 = vmatpush.bf16.msra.mxu0 %v771
  %793 = vmatpush.bf16.msra.mxu0 %v770
  %794 = vmatpush.bf16.msra.mxu0 %v769
  %795 = vmatpush.bf16.msra.mxu0 %v768
  %796 = vmatmul.bf16.gmra.mxu0 %v777
  %v797 = vpop.f32.mrf.mxu0
  %v798 = vadd.f32 %v750, %v797
  %v799 = vpop.f32.mrf.mxu0
  %v800 = vadd.f32 %v750, %v799
  %801 = vmatmul.bf16.gmra.mxu0 %v780
  %v802 = vpop.f32.mrf.mxu0
  %v803 = vadd.f32 %v750, %v802
  %v804 = vpop.f32.mrf.mxu0
  %v805 = vadd.f32 %v750, %v804
  %806 = vmatmul.bf16.gmra.mxu0 %v783
  %v807 = vpop.f32.mrf.mxu0
  %v808 = vadd.f32 %v750, %v807
  %v809 = vpop.f32.mrf.mxu0
  %v810 = vadd.f32 %v750, %v809
  %811 = vmatmul.bf16.gmra.mxu0 %v786
  %v812 = vpop.f32.mrf.mxu0
  %v813 = vadd.f32 %v750, %v812
  %v814 = vpop.f32.mrf.mxu0
  %v815 = vadd.f32 %v750, %v814
  %816 = vdwg.mxu0
  %817 = vmax.xlane.f32.xlu0 %v798
  %v818 = vpop.xlane.xlu0 %817
  %819 = vmax.xlane.f32.xlu0 %v800
  %v820 = vpop.xlane.xlu0 %819
  %821 = vmax.xlane.f32.xlu0 %v803
  %v822 = vpop.xlane.xlu0 %821
  %823 = vmax.xlane.f32.xlu0 %v805
  %v824 = vpop.xlane.xlu0 %823
  %825 = vmax.xlane.f32.xlu0 %v808
  %v826 = vpop.xlane.xlu0 %825
  %827 = vmax.xlane.f32.xlu0 %v810
  %v828 = vpop.xlane.xlu0 %827
  %829 = vmax.xlane.f32.xlu0 %v813
  %v830 = vpop.xlane.xlu0 %829
  %831 = vmax.xlane.f32.xlu0 %v815
  %v832 = vpop.xlane.xlu0 %831
  %v833 = vsub.f32 %v798, %v818
  %v834 = vsub.f32 %v800, %v820
  %v835 = vsub.f32 %v803, %v822
  %v836 = vsub.f32 %v805, %v824
  %v837 = vsub.f32 %v808, %v826
  %v838 = vsub.f32 %v810, %v828
  %v839 = vsub.f32 %v813, %v830
  %v840 = vsub.f32 %v815, %v832
  %v841 = vmul.f32 %v833, 1.442695
  %v842 = vpow.pop %v841
  %v843 = vmul.f32 %v834, 1.442695
  %v844 = vpow.pop %v843
  %v845 = vmul.f32 %v835, 1.442695
  %v846 = vpow.pop %v845
  %v847 = vmul.f32 %v836, 1.442695
  %v848 = vpow.pop %v847
  %v849 = vmul.f32 %v837, 1.442695
  %v850 = vpow.pop %v849
  %v851 = vmul.f32 %v838, 1.442695
  %v852 = vpow.pop %v851
  %v853 = vmul.f32 %v839, 1.442695
  %v854 = vpow.pop %v853
  %v855 = vmul.f32 %v840, 1.442695
  %v856 = vpow.pop %v855
  %857 = vadd.xlane.f32.xlu0 %v842
  %v858 = vpop.xlane.xlu0 %857
  %859 = vadd.xlane.f32.xlu0 %v844
  %v860 = vpop.xlane.xlu0 %859
  %861 = vadd.xlane.f32.xlu0 %v846
  %v862 = vpop.xlane.xlu0 %861
  %863 = vadd.xlane.f32.xlu0 %v848
  %v864 = vpop.xlane.xlu0 %863
  %865 = vadd.xlane.f32.xlu0 %v850
  %v866 = vpop.xlane.xlu0 %865
  %867 = vadd.xlane.f32.xlu0 %v852
  %v868 = vpop.xlane.xlu0 %867
  %869 = vadd.xlane.f32.xlu0 %v854
  %v870 = vpop.xlane.xlu0 %869
  %871 = vadd.xlane.f32.xlu0 %v856
  %v872 = vpop.xlane.xlu0 %871
  %v873 = vlog2.pop %v858
  %v874 = vmul.f32 %v873, 0.6931472
  %v875 = vlog2.pop %v860
  %v876 = vmul.f32 %v875, 0.6931472
  %v877 = vlog2.pop %v862
  %v878 = vmul.f32 %v877, 0.6931472
  %v879 = vlog2.pop %v864
  %v880 = vmul.f32 %v879, 0.6931472
  %v881 = vlog2.pop %v866
  %v882 = vmul.f32 %v881, 0.6931472
  %v883 = vlog2.pop %v868
  %v884 = vmul.f32 %v883, 0.6931472
  %v885 = vlog2.pop %v870
  %v886 = vmul.f32 %v885, 0.6931472
  %v887 = vlog2.pop %v872
  %v888 = vmul.f32 %v887, 0.6931472
  %v889 = vsub.f32 %v833, %v874
  %v890 = vsub.f32 %v834, %v876
  %v891 = vsub.f32 %v835, %v878
  %v892 = vsub.f32 %v836, %v880
  %v893 = vsub.f32 %v837, %v882
  %v894 = vsub.f32 %v838, %v884
  %v895 = vsub.f32 %v839, %v886
  %v896 = vsub.f32 %v840, %v888
  %897 = vst [vmem:[%s12] sm:$0xff] %v889
  %898 = vst [vmem:[%s12 + $0x8] sm:$0xff] %v890
  %899 = vst [vmem:[%s12 + $0x10] sm:$0xff] %v891
  %900 = vst [vmem:[%s12 + $0x18] sm:$0xff] %v892
  %901 = vst [vmem:[%s12 + $0x20] sm:$0xff] %v893
  %902 = vst [vmem:[%s12 + $0x28] sm:$0xff] %v894
  %903 = vst [vmem:[%s12 + $0x30] sm:$0xff] %v895
  %904 = vst [vmem:[%s12 + $0x38] sm:$0xff] %v896
  // Predicated region
  $region50: #{net_forward.1} parent=0 // pred_check
    _
  $region51: #{net_forward.1} parent=0 // pred_check_branch
    %906 = sbr.rel (0) target = $region53
  $region52: #{net_forward.1} parent=0 // pred_region
    _
  $region53: #{net_forward.1} parent=0 // pred_fallthru
    _
  // Predicated region
  $region54: #{net_forward.1} parent=0 // pred_check
    _
  $region55: #{net_forward.1} parent=0 // pred_check_branch
    %908 = sbr.rel (0) target = $region57
  $region56: #{net_forward.1} parent=0 // pred_region
    _
  $region57: #{net_forward.1} parent=0 // pred_fallthru
    _

</llo_original>
